<compile_context>
chip_gen: v6e
topology: v6e:2x2x1
jax: 0.10.0
libtpu: 0.0.40
codegen_flags: <defaults>
</compile_context>

<pallas_src>
import jax
import jax.numpy as jnp
from jax.experimental import pallas as pl
from jax.experimental.pallas import tpu as pltpu


def _proj_mask_kernel(x_ref, w_ref, b_ref, out_ref, mask_ref):
    # x_ref:    (TM, Df)    row tile of flattened (B*S, Df) features
    # w_ref:    (Df, Dm)    projection weight (transposed vs torch), VMEM-resident
    # b_ref:    (1, Dm)     projection bias, VMEM-resident
    # out_ref:  (TM, Dm)    projected features
    # mask_ref: (1, 1, TM)  additive padding mask, lane-major (0 real token, -10e4 padding)
    x = x_ref[...]

    # Linear projection on the MXU (f32 accumulate), bias add on the VPU.
    y = jnp.dot(x, w_ref[...], preferred_element_type=jnp.float32) + b_ref[...]
    out_ref[...] = y.astype(out_ref.dtype)

    # Padding mask: a position is padding iff its feature vector sums to 0 (padding_idx=0),
    # matching generate_padding_mask: (sum(x, -1) == 0) * -10e4  (= -1e5, the reference's literal).
    # Reduce per row, then transpose (TM,1)->(1,TM) so the store is lane-dense (XLU op; free slot).
    row_sum_t = jnp.transpose(
        jnp.sum(x.astype(jnp.float32), axis=-1, keepdims=True))        # (1, TM)
    mask_vals = jnp.where(row_sum_t == jnp.float32(0.0),
                          jnp.float32(-10e4), jnp.float32(0.0))        # (1, TM)
    mask_ref[...] = mask_vals.reshape(mask_ref.shape).astype(mask_ref.dtype)


def feature_projection(features, weight_t, bias, *, tile_m=512, out_dtype=None):
    """Project (B, S, Df) -> (B, S, Dm) and build the (B, 1, 1, S) additive padding mask.

    weight_t is the transposed torch weight, shape (Df, Dm); bias shape (Dm,).
    """
    B, S, Df = features.shape
    Dm = weight_t.shape[1]
    if out_dtype is None:
        out_dtype = features.dtype

    # Flatten B*S into the matmul M dimension (free reshape, no copy).
    M = B * S
    x = features.reshape(M, Df)

    # Row tile: multiple of 8 sublanes, clamped to a single tile when M is small.
    # At production M prefer 512-1024 and (on v7x) a tile count that is a balanced
    # multiple of the core count; the single grid axis below is "parallel" for megacore.
    m_ceil8 = ((M + 7) // 8) * 8
    tm = min(max(tile_m, 8), m_ceil8)
    tm = ((tm + 7) // 8) * 8
    num_tiles = pl.cdiv(M, tm)

    in_itemsize = jnp.dtype(features.dtype).itemsize
    w_itemsize = jnp.dtype(weight_t.dtype).itemsize
    out_itemsize = jnp.dtype(out_dtype).itemsize

    # Scoped-VMEM budget for the pipeline (v5e default is only 16 MiB; v7x physical cap 64 MiB).
    vmem_bytes = (
        2 * tm * Df * in_itemsize        # double-buffered x tiles
        + 2 * tm * Dm * out_itemsize     # double-buffered out tiles
        + 2 * 8 * tm * 4                 # mask tiles (padded to 8 sublanes)
        + Df * Dm * w_itemsize           # weight, single buffer (Buffered(1))
        + 8 * Dm * 4                     # bias (padded)
    )
    vmem_limit = min(64 << 20, max(16 << 20, int(1.25 * vmem_bytes) + (2 << 20)))

    cost = pl.CostEstimate(
        flops=2 * M * Df * Dm,
        transcendentals=0,
        bytes_accessed=(M * Df * in_itemsize + Df * Dm * w_itemsize + Dm * 4
                        + M * Dm * out_itemsize + num_tiles * tm * 4),
    )

    out, mask_tiles = pl.pallas_call(
        _proj_mask_kernel,
        out_shape=(
            jax.ShapeDtypeStruct((M, Dm), out_dtype),
            jax.ShapeDtypeStruct((num_tiles, 1, tm), jnp.float32),
        ),
        grid_spec=pltpu.PrefetchScalarGridSpec(
            num_scalar_prefetch=0,
            grid=(num_tiles,),
            in_specs=[
                pl.BlockSpec((tm, Df), lambda i: (i, 0)),
                # Constant blocks: VMEM-resident, single pipeline buffer.
                pl.BlockSpec((Df, Dm), lambda i: (0, 0),
                             pipeline_mode=pl.Buffered(1)),
                pl.BlockSpec((1, Dm), lambda i: (0, 0),
                             pipeline_mode=pl.Buffered(1)),
            ],
            out_specs=[
                pl.BlockSpec((tm, Dm), lambda i: (i, 0)),
                pl.BlockSpec((1, 1, tm), lambda i: (i, 0, 0)),
            ],
        ),
        compiler_params=pltpu.CompilerParams(
            dimension_semantics=("parallel",),
            vmem_limit_bytes=vmem_limit,
        ),
        cost_estimate=cost,
    )(x, weight_t, bias.reshape(1, Dm))

    out = out.reshape(B, S, Dm)
    # Tiny (num_tiles*tm) slice on the mask only; the wide tensors are never padded/sliced.
    mask = mask_tiles.reshape(-1)[:M].reshape(B, 1, 1, S)
    return out, mask


def dual_feature_embedding(region_features, grid_features,
                           region_w_t, region_b, grid_w_t, grid_b,
                           *, tile_m=512, out_dtype=None):
    """Eval-mode forward of DualFeatureEmbedding (dropout = identity)."""
    region_out, region_masks = feature_projection(
        region_features, region_w_t, region_b, tile_m=tile_m, out_dtype=out_dtype)
    grid_out, grid_masks = feature_projection(
        grid_features, grid_w_t, grid_b, tile_m=tile_m, out_dtype=out_dtype)
    return (region_out, region_masks), (grid_out, grid_masks)


if __name__ == "__main__":
    # Small demo config (lane-aligned D_MODEL).
    B = 2
    N_REGIONS, D_REGION_FEATURE = 300, 64
    N_GRIDS, D_GRID_FEATURE = 196, 128
    D_MODEL = 128

    key = jax.random.PRNGKey(0)
    k_rx, k_gx, k_rw, k_rb, k_gw, k_gb = jax.random.split(key, 6)

    region_features = jax.random.normal(
        k_rx, (B, N_REGIONS, D_REGION_FEATURE), dtype=jnp.float32)
    grid_features = jax.random.normal(
        k_gx, (B, N_GRIDS, D_GRID_FEATURE), dtype=jnp.float32)

    # Introduce padding positions (all-zero feature vectors -> padding_idx=0).
    region_features = region_features.at[0, -7:, :].set(0.0)
    region_features = region_features.at[1, -25:, :].set(0.0)
    grid_features = grid_features.at[1, -12:, :].set(0.0)

    def init_linear(kw, kb, d_in, d_out):
        # nn.Linear init; torch weight (d_out, d_in) stored transposed as (d_in, d_out).
        bound = 1.0 / (d_in ** 0.5)
        w_t = jax.random.uniform(kw, (d_in, d_out), minval=-bound, maxval=bound,
                                 dtype=jnp.float32)
        b = jax.random.uniform(kb, (d_out,), minval=-bound, maxval=bound,
                               dtype=jnp.float32)
        return w_t, b

    region_w_t, region_b = init_linear(k_rw, k_rb, D_REGION_FEATURE, D_MODEL)
    grid_w_t, grid_b = init_linear(k_gw, k_gb, D_GRID_FEATURE, D_MODEL)

    (r_out, r_mask), (g_out, g_mask) = dual_feature_embedding(
        region_features, grid_features, region_w_t, region_b, grid_w_t, grid_b)
    jax.block_until_ready((r_out, r_mask, g_out, g_mask))

    # Plain-JAX reference (eval-mode torch semantics).
    def ref(feats, w_t, b):
        out = feats @ w_t + b
        mask = (jnp.sum(feats, axis=-1) == 0.0).astype(jnp.float32) * jnp.float32(-10e4)
        return out, mask.reshape(feats.shape[0], 1, 1, feats.shape[1])

    ref_r_out, ref_r_mask = ref(region_features, region_w_t, region_b)
    ref_g_out, ref_g_mask = ref(grid_features, grid_w_t, grid_b)

    assert r_out.shape == (B, N_REGIONS, D_MODEL)
    assert r_mask.shape == (B, 1, 1, N_REGIONS)
    assert g_out.shape == (B, N_GRIDS, D_MODEL)
    assert g_mask.shape == (B, 1, 1, N_GRIDS)
    assert jnp.allclose(r_out, ref_r_out, atol=1e-4, rtol=1e-4)
    assert jnp.allclose(g_out, ref_g_out, atol=1e-4, rtol=1e-4)
    assert jnp.array_equal(r_mask, ref_r_mask)
    assert jnp.array_equal(g_mask, ref_g_mask)

    print("KERNEL_OK")
</pallas_src>

<mosaic_0001>
module attributes {stable_mosaic.version = 11 : i64} {
  func.func @_proj_mask_kernel(%arg0: i32, %arg1: memref<512x64xf32, #tpu.memory_space<vmem>>, %arg2: memref<64x128xf32, #tpu.memory_space<vmem>>, %arg3: memref<1x128xf32, #tpu.memory_space<vmem>>, %arg4: memref<512x128xf32, #tpu.memory_space<vmem>>, %arg5: memref<1x1x512xf32, #tpu.memory_space<vmem>>) attributes {dimension_semantics = [#tpu.dimension_semantics<parallel>], iteration_bounds = array<i64: 2>, scalar_prefetch = 0 : i64, scratch_operands = 0 : i64, tpu.core_type = #tpu.core_type<tc>, window_params = [{transform_indices = @transform_0, window_bounds = array<i64: 512, 64>}, {pipeline_mode = #tpu.pipeline_mode<synchronous>, transform_indices = @transform_1, window_bounds = array<i64: 64, 128>}, {pipeline_mode = #tpu.pipeline_mode<synchronous>, transform_indices = @transform_2, window_bounds = array<i64: 1, 128>}, {transform_indices = @transform_3, window_bounds = array<i64: 512, 128>}, {transform_indices = @transform_4, window_bounds = array<i64: 1, 1, 512>}]} {
    %c0 = arith.constant 0 : index
    %c0_0 = arith.constant 0 : index
    %0 = vector.load %arg1[%c0, %c0_0] : memref<512x64xf32, #tpu.memory_space<vmem>>, vector<512x64xf32>
    %c0_1 = arith.constant 0 : index
    %c0_2 = arith.constant 0 : index
    %1 = vector.load %arg2[%c0_1, %c0_2] : memref<64x128xf32, #tpu.memory_space<vmem>>, vector<64x128xf32>
    %cst = arith.constant dense<0.000000e+00> : vector<512x128xf32>
    %2 = tpu.matmul %0, %1, %cst {dimension_numbers = #tpu.dot_dimension_numbers<[1], [0], [0], [1], [0, 0, 1, 1], [], []>} : vector<512x64xf32>, vector<64x128xf32>, vector<512x128xf32> -> vector<512x128xf32>
    %c0_3 = arith.constant 0 : index
    %c0_4 = arith.constant 0 : index
    %3 = vector.load %arg3[%c0_3, %c0_4] : memref<1x128xf32, #tpu.memory_space<vmem>>, vector<1x128xf32>
    %4 = vector.broadcast %3 : vector<1x128xf32> to vector<512x128xf32>
    %5 = arith.addf %2, %4 : vector<512x128xf32>
    %c0_5 = arith.constant 0 : index
    %c0_6 = arith.constant 0 : index
    %6 = vector.load %arg4[%c0_5, %c0_6] : memref<512x128xf32, #tpu.memory_space<vmem>>, vector<512x128xf32>
    tpu.vector_store %arg4[%c0_5, %c0_6], %5 {strides = array<i32>} : memref<512x128xf32, #tpu.memory_space<vmem>>, vector<512x128xf32>,
    %cst_7 = arith.constant dense<0.000000e+00> : vector<512xf32>
    %7 = vector.multi_reduction <add>, %0, %cst_7 [1] : vector<512x64xf32> to vector<512xf32>
    %8 = vector.shape_cast %7 : vector<512xf32> to vector<512x1xf32>
    %9 = tpu.transpose %8, [1, 0] : vector<512x1xf32> -> vector<1x512xf32>
    %cst_8 = arith.constant 0.000000e+00 : f32
    %10 = vector.broadcast %cst_8 : f32 to vector<1x512xf32>
    %11 = arith.cmpf oeq, %9, %10 : vector<1x512xf32>
    %cst_9 = arith.constant -1.000000e+05 : f32
    %cst_10 = arith.constant 0.000000e+00 : f32
    %12 = vector.broadcast %cst_9 : f32 to vector<1x512xf32>
    %13 = vector.broadcast %cst_10 : f32 to vector<1x512xf32>
    %14 = arith.select %11, %12, %13 : vector<1x512xi1>, vector<1x512xf32>
    %15 = vector.shape_cast %14 : vector<1x512xf32> to vector<1x1x512xf32>
    %c0_11 = arith.constant 0 : index
    %c0_12 = arith.constant 0 : index
    %c0_13 = arith.constant 0 : index
    %16 = vector.load %arg5[%c0_11, %c0_12, %c0_13] : memref<1x1x512xf32, #tpu.memory_space<vmem>>, vector<1x1x512xf32>
    tpu.vector_store %arg5[%c0_11, %c0_12, %c0_13], %15 {strides = array<i32>} : memref<1x1x512xf32, #tpu.memory_space<vmem>>, vector<1x1x512xf32>,
    return
  }
  func.func @transform_0(%arg0: i32) -> (i32, i32) {
    %c0_i32 = arith.constant 0 : i32
    %c0_i32_0 = arith.constant 0 : i32
    return %arg0, %c0_i32 : i32, i32
  }
  func.func @transform_1(%arg0: i32) -> (i32, i32) {
    %c0_i32 = arith.constant 0 : i32
    %c0_i32_0 = arith.constant 0 : i32
    %c0_i32_1 = arith.constant 0 : i32
    return %c0_i32, %c0_i32_0 : i32, i32
  }
  func.func @transform_2(%arg0: i32) -> (i32, i32) {
    %c0_i32 = arith.constant 0 : i32
    %c0_i32_0 = arith.constant 0 : i32
    %c0_i32_1 = arith.constant 0 : i32
    return %c0_i32, %c0_i32_0 : i32, i32
  }
  func.func @transform_3(%arg0: i32) -> (i32, i32) {
    %c0_i32 = arith.constant 0 : i32
    %c0_i32_0 = arith.constant 0 : i32
    return %arg0, %c0_i32 : i32, i32
  }
  func.func @transform_4(%arg0: i32) -> (i32, i32, i32) {
    %c0_i32 = arith.constant 0 : i32
    %c0_i32_0 = arith.constant 0 : i32
    %c0_i32_1 = arith.constant 0 : i32
    return %arg0, %c0_i32, %c0_i32_0 : i32, i32, i32
  }
}

</mosaic_0001>

<llo_original>
// kernel: tpu_custom_call.1
$region0: #{tpu_custom_call.1}
  #allocation0 [shape = 'u32[]', space=smem, size = 0x4, offset = 0x4, fixed_abs, tag = 'smem constant byte address 0x4 - core index']
  #allocation1 [shape = 'u32[144,128]{1,0:T(1,128)}', space=vmem, size = 0x12000, scoped, tag = 'internal scratch']
  %s0 = inlined_call_operand.vmem [shape: f32[600,64], index: 0, kind: input, shape index: {}]
  %s1 = inlined_call_operand.vmem [shape: f32[64,128], index: 1, kind: input, shape index: {}]
  %s2 = inlined_call_operand.vmem [shape: f32[1,128], index: 2, kind: input, shape index: {}]
  %s3 = inlined_call_operand.hbm [shape: f32[600,128], index: 3, kind: output, shape index: {0}]
  %s4 = inlined_call_operand.hbm [shape: f32[2,1,512], index: 4, kind: output, shape index: {1}]
  %5 = xla_tuple %s3, %s4
  %s6 = sld [smem:[#allocation0]]
  $region53: #{tpu_custom_call.1} parent=0
    _
  %s8 = ssub.s32 1, %s6
  %s9 = scalar_select 0, %s8, %s6
  $region1: #{tpu_custom_call.1} parent=0
    #allocation2 [shape = 'u8[524288]{0}', space=vmem, size = 0x80000, scoped, tag = 'output window, operand 0']
    #allocation3 [shape = 's32[2]{0}', space=sflag, size = 0x8, scoped, tag = 'scoped memory for tpu_custom_call.1']
    #allocation4 [shape = 'u8[4096]{0}', space=vmem, size = 0x1000, scoped, tag = 'output window, operand 1']
    #allocation5 [shape = 's32[2]{0}', space=sflag, size = 0x8, scoped, tag = 'scoped memory for tpu_custom_call.1']
    %10 = vsyncpa [#allocation3], 0
    %s11 = scalar_lea.sflag [#allocation3], 1
    %12 = vsyncpa %s11, 0
    %13 = vsyncpa [#allocation5], 0
    %s14 = scalar_lea.sflag [#allocation5], 1
    %15 = vsyncpa %s14, 0
    loop: start=0, step=1, limit=4
    $region2: #{tpu_custom_call.1} parent=1 // loop_pre_header
      _
    $region3: #{tpu_custom_call.1} parent=1 // loop_header
      %s17 = sphi 0, %s21
      %p18 = scmp.ge.s32.totalorder %s17, 4
      %s27 = sphi 0, %s29
      %s30 = sphi 0, %s27
      %s31 = sphi 0, %s30
      %s47 = sphi 0, %s31
      %s51 = sphi 0, %s51
      %s53 = sphi 0, %s51
      %s54 = sphi 0, %s53
      %s68 = sphi 0, %s54
      %s72 = sphi 0, %s72
      %s74 = sphi 0, %s72
      %s75 = sphi 0, %s74
      %s89 = sphi 0, %s75
      %s95 = sphi 0, %s97
      %s98 = sphi 0, %s95
      %s99 = sphi 0, %s98
      %s115 = sphi 0, %s99
      %s121 = sphi 0, %s123
      %s124 = sphi 0, %s121
      %s125 = sphi 0, %s124
      %s141 = sphi 0, %s125
    $region4: #{tpu_custom_call.1} parent=1 // loop_header_branch
      %20 = sbr.rel (%p18) target = $region8
    $region5: #{tpu_custom_call.1} parent=1 // loop_body
      %s22 = ssub.s32 %s17, 1
      %s23 = ssub.s32 %s17, 2
      %s24 = sadd.s32 %s17, 1
      %s25 = ssub.s32 %s17, %s24
      %p26 = scmp.eq.s32.totalorder %s25, 0
      %s28 = sadd.s32 %s27, 1
      %s29 = scalar_select %p26, %s27, %s28
      %p32 = pneg %p26
      %p33 = scmp.eq.s32.totalorder %s17, 1
      %p34 = por %p32, %p33
      %p35 = scmp.ne.s32.totalorder %s27, %s30
      %p36 = scmp.eq.s32.totalorder %s17, 0
      %p37 = por %p35, %p36
      %p38 = scmp.ne.s32.totalorder %s27, %s30
      %p39 = scmp.eq.s32.totalorder %s22, 1
      %p40 = por %p38, %p39
      %p41 = scmp.ne.s32.totalorder %s30, %s31
      %p42 = scmp.eq.s32.totalorder %s22, 0
      %p43 = por %p41, %p42
      %p44 = scmp.ne.s32.totalorder %s30, %s31
      %p45 = scmp.eq.s32.totalorder %s23, 1
      %p46 = por %p44, %p45
      %p48 = scmp.ne.s32.totalorder %s31, %s47
      %p49 = scmp.eq.s32.totalorder %s23, 0
      %p50 = por %p48, %p49
      %s52 = sadd.s32 %s51, 1
      %p55 = scmp.eq.s32.totalorder %s17, 1
      %p56 = scmp.ne.s32.totalorder %s51, %s53
      %p57 = scmp.eq.s32.totalorder %s17, 0
      %p58 = por %p56, %p57
      %p59 = scmp.ne.s32.totalorder %s51, %s53
      %p60 = scmp.eq.s32.totalorder %s22, 1
      %p61 = por %p59, %p60
      %p62 = scmp.ne.s32.totalorder %s53, %s54
      %p63 = scmp.eq.s32.totalorder %s22, 0
      %p64 = por %p62, %p63
      %p65 = scmp.ne.s32.totalorder %s53, %s54
      %p66 = scmp.eq.s32.totalorder %s23, 1
      %p67 = por %p65, %p66
      %p69 = scmp.ne.s32.totalorder %s54, %s68
      %p70 = scmp.eq.s32.totalorder %s23, 0
      %p71 = por %p69, %p70
      %s73 = sadd.s32 %s72, 1
      %p76 = scmp.eq.s32.totalorder %s17, 1
      %p77 = scmp.ne.s32.totalorder %s72, %s74
      %p78 = scmp.eq.s32.totalorder %s17, 0
      %p79 = por %p77, %p78
      %p80 = scmp.ne.s32.totalorder %s72, %s74
      %p81 = scmp.eq.s32.totalorder %s22, 1
      %p82 = por %p80, %p81
      %p83 = scmp.ne.s32.totalorder %s74, %s75
      %p84 = scmp.eq.s32.totalorder %s22, 0
      %p85 = por %p83, %p84
      %p86 = scmp.ne.s32.totalorder %s74, %s75
      %p87 = scmp.eq.s32.totalorder %s23, 1
      %p88 = por %p86, %p87
      %p90 = scmp.ne.s32.totalorder %s75, %s89
      %p91 = scmp.eq.s32.totalorder %s23, 0
      %p92 = por %p90, %p91
      %s93 = ssub.s32 %s17, %s24
      %p94 = scmp.eq.s32.totalorder %s93, 0
      %s96 = sadd.s32 %s95, 1
      %s97 = scalar_select %p94, %s95, %s96
      %p100 = pneg %p94
      %p101 = scmp.eq.s32.totalorder %s17, 1
      %p102 = por %p100, %p101
      %p103 = scmp.ne.s32.totalorder %s95, %s98
      %p104 = scmp.eq.s32.totalorder %s17, 0
      %p105 = por %p103, %p104
      %p106 = scmp.ne.s32.totalorder %s95, %s98
      %p107 = scmp.eq.s32.totalorder %s22, 1
      %p108 = por %p106, %p107
      %p109 = scmp.ne.s32.totalorder %s98, %s99
      %p110 = scmp.eq.s32.totalorder %s22, 0
      %p111 = por %p109, %p110
      %p112 = scmp.ne.s32.totalorder %s98, %s99
      %p113 = scmp.eq.s32.totalorder %s23, 1
      %p114 = por %p112, %p113
      %p116 = scmp.ne.s32.totalorder %s99, %s115
      %p117 = scmp.eq.s32.totalorder %s23, 0
      %p118 = por %p116, %p117
      %s119 = ssub.s32 %s17, %s24
      %p120 = scmp.eq.s32.totalorder %s119, 0
      %s122 = sadd.s32 %s121, 1
      %s123 = scalar_select %p120, %s121, %s122
      %p126 = pneg %p120
      %p127 = scmp.eq.s32.totalorder %s17, 1
      %p128 = por %p126, %p127
      %p129 = scmp.ne.s32.totalorder %s121, %s124
      %p130 = scmp.eq.s32.totalorder %s17, 0
      %p131 = por %p129, %p130
      %p132 = scmp.ne.s32.totalorder %s121, %s124
      %p133 = scmp.eq.s32.totalorder %s22, 1
      %p134 = por %p132, %p133
      %p135 = scmp.ne.s32.totalorder %s124, %s125
      %p136 = scmp.eq.s32.totalorder %s22, 0
      %p137 = por %p135, %p136
      %p138 = scmp.ne.s32.totalorder %s124, %s125
      %p139 = scmp.eq.s32.totalorder %s23, 1
      %p140 = por %p138, %p139
      %p142 = scmp.ne.s32.totalorder %s125, %s141
      %p143 = scmp.eq.s32.totalorder %s23, 0
      %p144 = por %p142, %p143
      %p145 = scmp.le.s32.totalorder 1, %s17
      %p146 = scmp.lt.s32.totalorder %s17, 3
      %p147 = pnand %p145, %p146
      %p148 = pneg %p147
      // Predicated region
      $region9: #{tpu_custom_call.1} parent=5 // pred_check
        _
      $region10: #{tpu_custom_call.1} parent=5 // pred_check_branch
        %150 = sbr.rel (%p147) target = $region12
      $region11: #{tpu_custom_call.1} parent=5 // pred_region
        %s151 = ssub.s32 %s17, 1
        // Predicated region
        $region13: #{tpu_custom_call.1} parent=11 // pred_check
          %p152 = pneg %p64
        $region14: #{tpu_custom_call.1} parent=11 // pred_check_branch
          %154 = sbr.rel (%p152) target = $region16
        $region15: #{tpu_custom_call.1} parent=11 // pred_region
          _
        $region16: #{tpu_custom_call.1} parent=11 // pred_fallthru
          _
        // Predicated region
        $region17: #{tpu_custom_call.1} parent=11 // pred_check
          %p155 = pneg %p85
        $region18: #{tpu_custom_call.1} parent=11 // pred_check_branch
          %157 = sbr.rel (%p155) target = $region20
        $region19: #{tpu_custom_call.1} parent=11 // pred_region
          _
        $region20: #{tpu_custom_call.1} parent=11 // pred_fallthru
          _
      $region12: #{tpu_custom_call.1} parent=5 // pred_fallthru
        _
      %p158 = scmp.lt.s32.totalorder %s17, 2
      // Predicated region
      $region21: #{tpu_custom_call.1} parent=5 // pred_check
        %p159 = pneg %p158
      $region22: #{tpu_custom_call.1} parent=5 // pred_check_branch
        %161 = sbr.rel (%p159) target = $region24
      $region23: #{tpu_custom_call.1} parent=5 // pred_region
        // Predicated region
        $region25: #{tpu_custom_call.1} parent=23 // pred_check
          %p162 = pneg %p37
        $region26: #{tpu_custom_call.1} parent=23 // pred_check_branch
          %164 = sbr.rel (%p162) target = $region28
        $region27: #{tpu_custom_call.1} parent=23 // pred_region
          %s165 = smul.u32 64, %s17
          %s166 = ssub.s32 75, %s165
          %p167 = scmp.lt.s32.totalorder %s166, 64
          %s168 = scalar_select %p167, %s166, 64
          %s169 = smul.u32 128, %s168
          %p170 = scmp.lt.s32.totalorder %s165, 74
          %s171 = scalar_select %p170, %s165, 74
          %s172 = smul.addr %s171, 8
          %s173 = scalar_lea.vmem %s0, %s172
          %s174 = smul.u32 64, %s17
          %s175 = ssub.s32 75, %s174
          %p176 = scmp.lt.s32.totalorder %s175, 64
          %s177 = scalar_select %p176, %s175, 64
          %s178 = smul.u32 128, %s177
        $region28: #{tpu_custom_call.1} parent=23 // pred_fallthru
          _
      $region24: #{tpu_custom_call.1} parent=5 // pred_fallthru
        _
      %p179 = scmp.le.s32.totalorder 1, %s17
      %p180 = scmp.lt.s32.totalorder %s17, 3
      %p181 = pnand %p179, %p180
      %p182 = pneg %p181
      // Predicated region
      $region29: #{tpu_custom_call.1} parent=5 // pred_check
        _
      $region30: #{tpu_custom_call.1} parent=5 // pred_check_branch
        %184 = sbr.rel (%p181) target = $region32
      $region31: #{tpu_custom_call.1} parent=5 // pred_region
        %s185 = ssub.s32 %s17, 1
        %s186 = smul.u32 64, %s22
        %s187 = ssub.s32 75, %s186
        %p188 = scmp.lt.s32.totalorder %s187, 64
        %s189 = scalar_select %p188, %s187, 64
        %s190 = smul.u32 128, %s189
        %p191 = scmp.lt.s32.totalorder %s186, 74
        %s192 = scalar_select %p191, %s186, 74
        %s193 = smul.addr %s192, 8
        %s194 = scalar_lea.vmem %s0, %s193
        %p195 = pneg %p43
        %p196 = pneg %p40
        %p197 = pneg %p64
        %p198 = pneg %p61
        %p199 = pneg %p85
        %p200 = pneg %p82
        %p201 = pneg %p111
        %p202 = pneg %p108
        %s203 = sand.u32 %s98, 1
        %s204 = scalar_lea.sflag [#allocation3], %s203
        %s205 = sand.u32 %s98, 1
        %s206 = smul.addr %s205, 512
        %s207 = scalar_lea.vmem [#allocation2], %s206
        %p208 = pneg %p137
        %p209 = pneg %p134
        %s210 = sand.u32 %s124, 1
        %s211 = scalar_lea.sflag [#allocation5], %s210
        %s212 = sand.u32 %s124, 1
        %s213 = smul.addr %s212, 4
        %s214 = scalar_lea.vmem [#allocation4], %s213
        %s215 = smul.u32 64, %s22
        %s216 = ssub.s32 75, %s215
        %p217 = scmp.lt.s32.totalorder %s216, 64
        %s218 = scalar_select %p217, %s216, 64
        %s219 = smul.u32 128, %s218
        %p220 = scmp.lt.s32.totalorder %s215, 74
        %s221 = scalar_select %p220, %s215, 74
        %s222 = smul.addr %s221, 8
        %s223 = scalar_lea.vmem %s0, %s222
        %s224 = smul.u32 64, %s22
        %s225 = ssub.s32 75, %s224
        %p226 = scmp.lt.s32.totalorder %s225, 64
        %s227 = scalar_select %p226, %s225, 64
        %s228 = smul.u32 128, %s227
        %s229 = smul.u32 64, %s22
        %s230 = ssub.s32 75, %s229
        %p231 = scmp.lt.s32.totalorder %s230, 64
        %s232 = scalar_select %p231, %s230, 64
        %s233 = smul.u32 128, %s232
        %v234 = vld [vmem:[%s223] sm:$0xff]
        %v235 = vld [vmem:[%s223 + $0x8] sm:$0xff]
        %v236 = vld [vmem:[%s223 + $0x10] sm:$0xff]
        %v237 = vld [vmem:[%s223 + $0x18] sm:$0xff]
        %v238 = vld [vmem:[%s223 + $0x20] sm:$0xff]
        %v239 = vld [vmem:[%s223 + $0x28] sm:$0xff]
        %v240 = vld [vmem:[%s223 + $0x30] sm:$0xff]
        %v241 = vld [vmem:[%s223 + $0x38] sm:$0xff]
        %v242 = vld [vmem:[%s223 + $0x40] sm:$0xff]
        %v243 = vld [vmem:[%s223 + $0x48] sm:$0xff]
        %v244 = vld [vmem:[%s223 + $0x50] sm:$0xff]
        %v245 = vld [vmem:[%s223 + $0x58] sm:$0xff]
        %v246 = vld [vmem:[%s223 + $0x60] sm:$0xff]
        %v247 = vld [vmem:[%s223 + $0x68] sm:$0xff]
        %v248 = vld [vmem:[%s223 + $0x70] sm:$0xff]
        %v249 = vld [vmem:[%s223 + $0x78] sm:$0xff]
        %v250 = vld [vmem:[%s223 + $0x80] sm:$0xff]
        %v251 = vld [vmem:[%s223 + $0x88] sm:$0xff]
        %v252 = vld [vmem:[%s223 + $0x90] sm:$0xff]
        %v253 = vld [vmem:[%s223 + $0x98] sm:$0xff]
        %v254 = vld [vmem:[%s223 + $0xa0] sm:$0xff]
        %v255 = vld [vmem:[%s223 + $0xa8] sm:$0xff]
        %v256 = vld [vmem:[%s223 + $0xb0] sm:$0xff]
        %v257 = vld [vmem:[%s223 + $0xb8] sm:$0xff]
        %v258 = vld [vmem:[%s223 + $0xc0] sm:$0xff]
        %v259 = vld [vmem:[%s223 + $0xc8] sm:$0xff]
        %v260 = vld [vmem:[%s223 + $0xd0] sm:$0xff]
        %v261 = vld [vmem:[%s223 + $0xd8] sm:$0xff]
        %v262 = vld [vmem:[%s223 + $0xe0] sm:$0xff]
        %v263 = vld [vmem:[%s223 + $0xe8] sm:$0xff]
        %v264 = vld [vmem:[%s223 + $0xf0] sm:$0xff]
        %v265 = vld [vmem:[%s223 + $0xf8] sm:$0xff]
        %v266 = vld [vmem:[%s223 + $0x100] sm:$0xff]
        %v267 = vld [vmem:[%s223 + $0x108] sm:$0xff]
        %v268 = vld [vmem:[%s223 + $0x110] sm:$0xff]
        %v269 = vld [vmem:[%s223 + $0x118] sm:$0xff]
        %v270 = vld [vmem:[%s223 + $0x120] sm:$0xff]
        %v271 = vld [vmem:[%s223 + $0x128] sm:$0xff]
        %v272 = vld [vmem:[%s223 + $0x130] sm:$0xff]
        %v273 = vld [vmem:[%s223 + $0x138] sm:$0xff]
        %v274 = vld [vmem:[%s223 + $0x140] sm:$0xff]
        %v275 = vld [vmem:[%s223 + $0x148] sm:$0xff]
        %v276 = vld [vmem:[%s223 + $0x150] sm:$0xff]
        %v277 = vld [vmem:[%s223 + $0x158] sm:$0xff]
        %v278 = vld [vmem:[%s223 + $0x160] sm:$0xff]
        %v279 = vld [vmem:[%s223 + $0x168] sm:$0xff]
        %v280 = vld [vmem:[%s223 + $0x170] sm:$0xff]
        %v281 = vld [vmem:[%s223 + $0x178] sm:$0xff]
        %v282 = vld [vmem:[%s223 + $0x180] sm:$0xff]
        %v283 = vld [vmem:[%s223 + $0x188] sm:$0xff]
        %v284 = vld [vmem:[%s223 + $0x190] sm:$0xff]
        %v285 = vld [vmem:[%s223 + $0x198] sm:$0xff]
        %v286 = vld [vmem:[%s223 + $0x1a0] sm:$0xff]
        %v287 = vld [vmem:[%s223 + $0x1a8] sm:$0xff]
        %v288 = vld [vmem:[%s223 + $0x1b0] sm:$0xff]
        %v289 = vld [vmem:[%s223 + $0x1b8] sm:$0xff]
        %v290 = vld [vmem:[%s223 + $0x1c0] sm:$0xff]
        %v291 = vld [vmem:[%s223 + $0x1c8] sm:$0xff]
        %v292 = vld [vmem:[%s223 + $0x1d0] sm:$0xff]
        %v293 = vld [vmem:[%s223 + $0x1d8] sm:$0xff]
        %v294 = vld [vmem:[%s223 + $0x1e0] sm:$0xff]
        %v295 = vld [vmem:[%s223 + $0x1e8] sm:$0xff]
        %v296 = vld [vmem:[%s223 + $0x1f0] sm:$0xff]
        %v297 = vld [vmem:[%s223 + $0x1f8] sm:$0xff]
        %v298 = vld [vmem:[%s1] sm:$0xff]
        %v299 = vld [vmem:[%s1 + $0x8] sm:$0xff]
        %v300 = vld [vmem:[%s1 + $0x10] sm:$0xff]
        %v301 = vld [vmem:[%s1 + $0x18] sm:$0xff]
        %v302 = vld [vmem:[%s1 + $0x20] sm:$0xff]
        %v303 = vld [vmem:[%s1 + $0x28] sm:$0xff]
        %v304 = vld [vmem:[%s1 + $0x30] sm:$0xff]
        %v305 = vld [vmem:[%s1 + $0x38] sm:$0xff]
        %v306 = vld [vmem:[%s2] sm:$0x1]
        %v308 = vlaneseq
        %v309 = vshrl.u32 %v308, 7
        %v310 = vsub.s32 0, %v309
        %v311 = vrot.slane %v306, %v310
        %vm313 = vcmask 523264
        %v315 = vsel %vm313, %v234, 0
        %v318 = vsel %vm313, %v235, 0
        %v321 = vsel %vm313, %v236, 0
        %v324 = vsel %vm313, %v237, 0
        %v327 = vsel %vm313, %v238, 0
        %v330 = vsel %vm313, %v239, 0
        %v333 = vsel %vm313, %v240, 0
        %v336 = vsel %vm313, %v241, 0
        %v339 = vsel %vm313, %v242, 0
        %v342 = vsel %vm313, %v243, 0
        %v345 = vsel %vm313, %v244, 0
        %v348 = vsel %vm313, %v245, 0
        %v351 = vsel %vm313, %v246, 0
        %v354 = vsel %vm313, %v247, 0
        %v357 = vsel %vm313, %v248, 0
        %v360 = vsel %vm313, %v249, 0
        %v363 = vsel %vm313, %v250, 0
        %v366 = vsel %vm313, %v251, 0
        %v369 = vsel %vm313, %v252, 0
        %v372 = vsel %vm313, %v253, 0
        %v375 = vsel %vm313, %v254, 0
        %v378 = vsel %vm313, %v255, 0
        %v381 = vsel %vm313, %v256, 0
        %v384 = vsel %vm313, %v257, 0
        %v387 = vsel %vm313, %v258, 0
        %v390 = vsel %vm313, %v259, 0
        %v393 = vsel %vm313, %v260, 0
        %v396 = vsel %vm313, %v261, 0
        %v399 = vsel %vm313, %v262, 0
        %v402 = vsel %vm313, %v263, 0
        %v405 = vsel %vm313, %v264, 0
        %v408 = vsel %vm313, %v265, 0
        %v411 = vsel %vm313, %v266, 0
        %v414 = vsel %vm313, %v267, 0
        %v417 = vsel %vm313, %v268, 0
        %v420 = vsel %vm313, %v269, 0
        %v423 = vsel %vm313, %v270, 0
        %v426 = vsel %vm313, %v271, 0
        %v429 = vsel %vm313, %v272, 0
        %v432 = vsel %vm313, %v273, 0
        %v435 = vsel %vm313, %v274, 0
        %v438 = vsel %vm313, %v275, 0
        %v441 = vsel %vm313, %v276, 0
        %v444 = vsel %vm313, %v277, 0
        %v447 = vsel %vm313, %v278, 0
        %v450 = vsel %vm313, %v279, 0
        %v453 = vsel %vm313, %v280, 0
        %v456 = vsel %vm313, %v281, 0
        %v459 = vsel %vm313, %v282, 0
        %v462 = vsel %vm313, %v283, 0
        %v465 = vsel %vm313, %v284, 0
        %v468 = vsel %vm313, %v285, 0
        %v471 = vsel %vm313, %v286, 0
        %v474 = vsel %vm313, %v287, 0
        %v477 = vsel %vm313, %v288, 0
        %v480 = vsel %vm313, %v289, 0
        %v483 = vsel %vm313, %v290, 0
        %v486 = vsel %vm313, %v291, 0
        %v489 = vsel %vm313, %v292, 0
        %v492 = vsel %vm313, %v293, 0
        %v495 = vsel %vm313, %v294, 0
        %v498 = vsel %vm313, %v295, 0
        %v501 = vsel %vm313, %v296, 0
        %v504 = vsel %vm313, %v297, 0
        %506 = vmatprep.subr.mxu0 0.0
        %507 = vmatpush1.msra.mxu0 0.0
        %508 = vmatprep.subr.mxu0 0.0
        %509 = vmatpush1.msra.mxu0 0.0
        %510 = vmatprep.subr.mxu0 0.0
        %511 = vmatpush1.msra.mxu0 0.0
        %512 = vmatprep.subr.mxu0 0.0
        %513 = vmatpush1.msra.mxu0 0.0
        %514 = vmatprep.subr.mxu0 0.0
        %515 = vmatpush1.msra.mxu0 0.0
        %516 = vmatprep.subr.mxu0 0.0
        %517 = vmatpush1.msra.mxu0 0.0
        %518 = vmatprep.subr.mxu0 0.0
        %519 = vmatpush1.msra.mxu0 0.0
        %520 = vmatprep.subr.mxu0 0.0
        %521 = vmatpush1.msra.mxu0 0.0
        %522 = vmatprep.subr.mxu0 0.0
        %523 = vmatpush1.msra.mxu0 %v305
        %524 = vmatprep.subr.mxu0 0.0
        %525 = vmatpush1.msra.mxu0 %v304
        %526 = vmatprep.subr.mxu0 0.0
        %527 = vmatpush1.msra.mxu0 %v303
        %528 = vmatprep.subr.mxu0 0.0
        %529 = vmatpush1.msra.mxu0 %v302
        %530 = vmatprep.subr.mxu0 0.0
        %531 = vmatpush1.msra.mxu0 %v301
        %532 = vmatprep.subr.mxu0 0.0
        %533 = vmatpush1.msra.mxu0 %v300
        %534 = vmatprep.subr.mxu0 0.0
        %535 = vmatpush1.msra.mxu0 %v299
        %536 = vmatprep.subr.mxu0 0.0
        %537 = vmatpush1.msra.mxu0 %v298
        %538 = vmatprep.subr.mxu0 0.0
        %539 = vmatpush2.msra.mxu0 0.0
        %540 = vmatprep.subr.mxu0 0.0
        %541 = vmatpush2.msra.mxu0 0.0
        %542 = vmatprep.subr.mxu0 0.0
        %543 = vmatpush2.msra.mxu0 0.0
        %544 = vmatprep.subr.mxu0 0.0
        %545 = vmatpush2.msra.mxu0 0.0
        %546 = vmatprep.subr.mxu0 0.0
        %547 = vmatpush2.msra.mxu0 0.0
        %548 = vmatprep.subr.mxu0 0.0
        %549 = vmatpush2.msra.mxu0 0.0
        %550 = vmatprep.subr.mxu0 0.0
        %551 = vmatpush2.msra.mxu0 0.0
        %552 = vmatprep.subr.mxu0 0.0
        %553 = vmatpush2.msra.mxu0 0.0
        %554 = vmatprep.subr.mxu0 0.0
        %555 = vmatpush2.msra.mxu0 0.0
        %556 = vmatprep.subr.mxu0 0.0
        %557 = vmatpush2.msra.mxu0 0.0
        %558 = vmatprep.subr.mxu0 0.0
        %559 = vmatpush2.msra.mxu0 0.0
        %560 = vmatprep.subr.mxu0 0.0
        %561 = vmatpush2.msra.mxu0 0.0
        %562 = vmatprep.subr.mxu0 0.0
        %563 = vmatpush2.msra.mxu0 0.0
        %564 = vmatprep.subr.mxu0 0.0
        %565 = vmatpush2.msra.mxu0 0.0
        %566 = vmatprep.subr.mxu0 0.0
        %567 = vmatpush2.msra.mxu0 0.0
        %568 = vmatprep.subr.mxu0 0.0
        %569 = vmatpush2.msra.mxu0 0.0
        %570 = vmatprep.mubr.f32.mxu0 0.0
        %571 = vmatmul.mubr.f32.gmra.mxu0 %v315
        %v572 = vpop.f32.mrf.mxu0
        %v573 = vadd.f32 %v311, %v572
        %v574 = vpop.f32.mrf.mxu0
        %575 = vmatprep.mubr.f32.mxu0 0.0
        %576 = vmatmul.mubr.f32.gmra.mxu0 %v318
        %v577 = vpop.f32.mrf.mxu0
        %v578 = vadd.f32 %v311, %v577
        %v579 = vpop.f32.mrf.mxu0
        %580 = vmatprep.mubr.f32.mxu0 0.0
        %581 = vmatmul.mubr.f32.gmra.mxu0 %v321
        %v582 = vpop.f32.mrf.mxu0
        %v583 = vadd.f32 %v311, %v582
        %v584 = vpop.f32.mrf.mxu0
        %585 = vmatprep.mubr.f32.mxu0 0.0
        %586 = vmatmul.mubr.f32.gmra.mxu0 %v324
        %v587 = vpop.f32.mrf.mxu0
        %v588 = vadd.f32 %v311, %v587
        %v589 = vpop.f32.mrf.mxu0
        %590 = vmatprep.mubr.f32.mxu0 0.0
        %591 = vmatmul.mubr.f32.gmra.mxu0 %v327
        %v592 = vpop.f32.mrf.mxu0
        %v593 = vadd.f32 %v311, %v592
        %v594 = vpop.f32.mrf.mxu0
        %595 = vmatprep.mubr.f32.mxu0 0.0
        %596 = vmatmul.mubr.f32.gmra.mxu0 %v330
        %v597 = vpop.f32.mrf.mxu0
        %v598 = vadd.f32 %v311, %v597
        %v599 = vpop.f32.mrf.mxu0
        %600 = vmatprep.mubr.f32.mxu0 0.0
        %601 = vmatmul.mubr.f32.gmra.mxu0 %v333
        %v602 = vpop.f32.mrf.mxu0
        %v603 = vadd.f32 %v311, %v602
        %v604 = vpop.f32.mrf.mxu0
        %605 = vmatprep.mubr.f32.mxu0 0.0
        %606 = vmatmul.mubr.f32.gmra.mxu0 %v336
        %v607 = vpop.f32.mrf.mxu0
        %v608 = vadd.f32 %v311, %v607
        %v609 = vpop.f32.mrf.mxu0
        %610 = vmatprep.mubr.f32.mxu0 0.0
        %611 = vmatmul.mubr.f32.gmra.mxu0 %v339
        %v612 = vpop.f32.mrf.mxu0
        %v613 = vadd.f32 %v311, %v612
        %v614 = vpop.f32.mrf.mxu0
        %615 = vmatprep.mubr.f32.mxu0 0.0
        %616 = vmatmul.mubr.f32.gmra.mxu0 %v342
        %v617 = vpop.f32.mrf.mxu0
        %v618 = vadd.f32 %v311, %v617
        %v619 = vpop.f32.mrf.mxu0
        %620 = vmatprep.mubr.f32.mxu0 0.0
        %621 = vmatmul.mubr.f32.gmra.mxu0 %v345
        %v622 = vpop.f32.mrf.mxu0
        %v623 = vadd.f32 %v311, %v622
        %v624 = vpop.f32.mrf.mxu0
        %625 = vmatprep.mubr.f32.mxu0 0.0
        %626 = vmatmul.mubr.f32.gmra.mxu0 %v348
        %v627 = vpop.f32.mrf.mxu0
        %v628 = vadd.f32 %v311, %v627
        %v629 = vpop.f32.mrf.mxu0
        %630 = vmatprep.mubr.f32.mxu0 0.0
        %631 = vmatmul.mubr.f32.gmra.mxu0 %v351
        %v632 = vpop.f32.mrf.mxu0
        %v633 = vadd.f32 %v311, %v632
        %v634 = vpop.f32.mrf.mxu0
        %635 = vmatprep.mubr.f32.mxu0 0.0
        %636 = vmatmul.mubr.f32.gmra.mxu0 %v354
        %v637 = vpop.f32.mrf.mxu0
        %v638 = vadd.f32 %v311, %v637
        %v639 = vpop.f32.mrf.mxu0
        %640 = vmatprep.mubr.f32.mxu0 0.0
        %641 = vmatmul.mubr.f32.gmra.mxu0 %v357
        %v642 = vpop.f32.mrf.mxu0
        %v643 = vadd.f32 %v311, %v642
        %v644 = vpop.f32.mrf.mxu0
        %645 = vmatprep.mubr.f32.mxu0 0.0
        %646 = vmatmul.mubr.f32.gmra.mxu0 %v360
        %v647 = vpop.f32.mrf.mxu0
        %v648 = vadd.f32 %v311, %v647
        %v649 = vpop.f32.mrf.mxu0
        %650 = vmatprep.mubr.f32.mxu0 0.0
        %651 = vmatmul.mubr.f32.gmra.mxu0 %v363
        %v652 = vpop.f32.mrf.mxu0
        %v653 = vadd.f32 %v311, %v652
        %v654 = vpop.f32.mrf.mxu0
        %655 = vmatprep.mubr.f32.mxu0 0.0
        %656 = vmatmul.mubr.f32.gmra.mxu0 %v366
        %v657 = vpop.f32.mrf.mxu0
        %v658 = vadd.f32 %v311, %v657
        %v659 = vpop.f32.mrf.mxu0
        %660 = vmatprep.mubr.f32.mxu0 0.0
        %661 = vmatmul.mubr.f32.gmra.mxu0 %v369
        %v662 = vpop.f32.mrf.mxu0
        %v663 = vadd.f32 %v311, %v662
        %v664 = vpop.f32.mrf.mxu0
        %665 = vmatprep.mubr.f32.mxu0 0.0
        %666 = vmatmul.mubr.f32.gmra.mxu0 %v372
        %v667 = vpop.f32.mrf.mxu0
        %v668 = vadd.f32 %v311, %v667
        %v669 = vpop.f32.mrf.mxu0
        %670 = vmatprep.mubr.f32.mxu0 0.0
        %671 = vmatmul.mubr.f32.gmra.mxu0 %v375
        %v672 = vpop.f32.mrf.mxu0
        %v673 = vadd.f32 %v311, %v672
        %v674 = vpop.f32.mrf.mxu0
        %675 = vmatprep.mubr.f32.mxu0 0.0
        %676 = vmatmul.mubr.f32.gmra.mxu0 %v378
        %v677 = vpop.f32.mrf.mxu0
        %v678 = vadd.f32 %v311, %v677
        %v679 = vpop.f32.mrf.mxu0
        %680 = vmatprep.mubr.f32.mxu0 0.0
        %681 = vmatmul.mubr.f32.gmra.mxu0 %v381
        %v682 = vpop.f32.mrf.mxu0
        %v683 = vadd.f32 %v311, %v682
        %v684 = vpop.f32.mrf.mxu0
        %685 = vmatprep.mubr.f32.mxu0 0.0
        %686 = vmatmul.mubr.f32.gmra.mxu0 %v384
        %v687 = vpop.f32.mrf.mxu0
        %v688 = vadd.f32 %v311, %v687
        %v689 = vpop.f32.mrf.mxu0
        %690 = vmatprep.mubr.f32.mxu0 0.0
        %691 = vmatmul.mubr.f32.gmra.mxu0 %v387
        %v692 = vpop.f32.mrf.mxu0
        %v693 = vadd.f32 %v311, %v692
        %v694 = vpop.f32.mrf.mxu0
        %695 = vmatprep.mubr.f32.mxu0 0.0
        %696 = vmatmul.mubr.f32.gmra.mxu0 %v390
        %v697 = vpop.f32.mrf.mxu0
        %v698 = vadd.f32 %v311, %v697
        %v699 = vpop.f32.mrf.mxu0
        %700 = vmatprep.mubr.f32.mxu0 0.0
        %701 = vmatmul.mubr.f32.gmra.mxu0 %v393
        %v702 = vpop.f32.mrf.mxu0
        %v703 = vadd.f32 %v311, %v702
        %v704 = vpop.f32.mrf.mxu0
        %705 = vmatprep.mubr.f32.mxu0 0.0
        %706 = vmatmul.mubr.f32.gmra.mxu0 %v396
        %v707 = vpop.f32.mrf.mxu0
        %v708 = vadd.f32 %v311, %v707
        %v709 = vpop.f32.mrf.mxu0
        %710 = vmatprep.mubr.f32.mxu0 0.0
        %711 = vmatmul.mubr.f32.gmra.mxu0 %v399
        %v712 = vpop.f32.mrf.mxu0
        %v713 = vadd.f32 %v311, %v712
        %v714 = vpop.f32.mrf.mxu0
        %715 = vmatprep.mubr.f32.mxu0 0.0
        %716 = vmatmul.mubr.f32.gmra.mxu0 %v402
        %v717 = vpop.f32.mrf.mxu0
        %v718 = vadd.f32 %v311, %v717
        %v719 = vpop.f32.mrf.mxu0
        %720 = vmatprep.mubr.f32.mxu0 0.0
        %721 = vmatmul.mubr.f32.gmra.mxu0 %v405
        %v722 = vpop.f32.mrf.mxu0
        %v723 = vadd.f32 %v311, %v722
        %v724 = vpop.f32.mrf.mxu0
        %725 = vmatprep.mubr.f32.mxu0 0.0
        %726 = vmatmul.mubr.f32.gmra.mxu0 %v408
        %v727 = vpop.f32.mrf.mxu0
        %v728 = vadd.f32 %v311, %v727
        %v729 = vpop.f32.mrf.mxu0
        %730 = vmatprep.mubr.f32.mxu0 0.0
        %731 = vmatmul.mubr.f32.gmra.mxu0 %v411
        %v732 = vpop.f32.mrf.mxu0
        %v733 = vadd.f32 %v311, %v732
        %v734 = vpop.f32.mrf.mxu0
        %735 = vmatprep.mubr.f32.mxu0 0.0
        %736 = vmatmul.mubr.f32.gmra.mxu0 %v414
        %v737 = vpop.f32.mrf.mxu0
        %v738 = vadd.f32 %v311, %v737
        %v739 = vpop.f32.mrf.mxu0
        %740 = vmatprep.mubr.f32.mxu0 0.0
        %741 = vmatmul.mubr.f32.gmra.mxu0 %v417
        %v742 = vpop.f32.mrf.mxu0
        %v743 = vadd.f32 %v311, %v742
        %v744 = vpop.f32.mrf.mxu0
        %745 = vmatprep.mubr.f32.mxu0 0.0
        %746 = vmatmul.mubr.f32.gmra.mxu0 %v420
        %v747 = vpop.f32.mrf.mxu0
        %v748 = vadd.f32 %v311, %v747
        %v749 = vpop.f32.mrf.mxu0
        %750 = vmatprep.mubr.f32.mxu0 0.0
        %751 = vmatmul.mubr.f32.gmra.mxu0 %v423
        %v752 = vpop.f32.mrf.mxu0
        %v753 = vadd.f32 %v311, %v752
        %v754 = vpop.f32.mrf.mxu0
        %755 = vmatprep.mubr.f32.mxu0 0.0
        %756 = vmatmul.mubr.f32.gmra.mxu0 %v426
        %v757 = vpop.f32.mrf.mxu0
        %v758 = vadd.f32 %v311, %v757
        %v759 = vpop.f32.mrf.mxu0
        %760 = vmatprep.mubr.f32.mxu0 0.0
        %761 = vmatmul.mubr.f32.gmra.mxu0 %v429
        %v762 = vpop.f32.mrf.mxu0
        %v763 = vadd.f32 %v311, %v762
        %v764 = vpop.f32.mrf.mxu0
        %765 = vmatprep.mubr.f32.mxu0 0.0
        %766 = vmatmul.mubr.f32.gmra.mxu0 %v432
        %v767 = vpop.f32.mrf.mxu0
        %v768 = vadd.f32 %v311, %v767
        %v769 = vpop.f32.mrf.mxu0
        %770 = vmatprep.mubr.f32.mxu0 0.0
        %771 = vmatmul.mubr.f32.gmra.mxu0 %v435
        %v772 = vpop.f32.mrf.mxu0
        %v773 = vadd.f32 %v311, %v772
        %v774 = vpop.f32.mrf.mxu0
        %775 = vmatprep.mubr.f32.mxu0 0.0
        %776 = vmatmul.mubr.f32.gmra.mxu0 %v438
        %v777 = vpop.f32.mrf.mxu0
        %v778 = vadd.f32 %v311, %v777
        %v779 = vpop.f32.mrf.mxu0
        %780 = vmatprep.mubr.f32.mxu0 0.0
        %781 = vmatmul.mubr.f32.gmra.mxu0 %v441
        %v782 = vpop.f32.mrf.mxu0
        %v783 = vadd.f32 %v311, %v782
        %v784 = vpop.f32.mrf.mxu0
        %785 = vmatprep.mubr.f32.mxu0 0.0
        %786 = vmatmul.mubr.f32.gmra.mxu0 %v444
        %v787 = vpop.f32.mrf.mxu0
        %v788 = vadd.f32 %v311, %v787
        %v789 = vpop.f32.mrf.mxu0
        %790 = vmatprep.mubr.f32.mxu0 0.0
        %791 = vmatmul.mubr.f32.gmra.mxu0 %v447
        %v792 = vpop.f32.mrf.mxu0
        %v793 = vadd.f32 %v311, %v792
        %v794 = vpop.f32.mrf.mxu0
        %795 = vmatprep.mubr.f32.mxu0 0.0
        %796 = vmatmul.mubr.f32.gmra.mxu0 %v450
        %v797 = vpop.f32.mrf.mxu0
        %v798 = vadd.f32 %v311, %v797
        %v799 = vpop.f32.mrf.mxu0
        %800 = vmatprep.mubr.f32.mxu0 0.0
        %801 = vmatmul.mubr.f32.gmra.mxu0 %v453
        %v802 = vpop.f32.mrf.mxu0
        %v803 = vadd.f32 %v311, %v802
        %v804 = vpop.f32.mrf.mxu0
        %805 = vmatprep.mubr.f32.mxu0 0.0
        %806 = vmatmul.mubr.f32.gmra.mxu0 %v456
        %v807 = vpop.f32.mrf.mxu0
        %v808 = vadd.f32 %v311, %v807
        %v809 = vpop.f32.mrf.mxu0
        %810 = vmatprep.mubr.f32.mxu0 0.0
        %811 = vmatmul.mubr.f32.gmra.mxu0 %v459
        %v812 = vpop.f32.mrf.mxu0
        %v813 = vadd.f32 %v311, %v812
        %v814 = vpop.f32.mrf.mxu0
        %815 = vmatprep.mubr.f32.mxu0 0.0
        %816 = vmatmul.mubr.f32.gmra.mxu0 %v462
        %v817 = vpop.f32.mrf.mxu0
        %v818 = vadd.f32 %v311, %v817
        %v819 = vpop.f32.mrf.mxu0
        %820 = vmatprep.mubr.f32.mxu0 0.0
        %821 = vmatmul.mubr.f32.gmra.mxu0 %v465
        %v822 = vpop.f32.mrf.mxu0
        %v823 = vadd.f32 %v311, %v822
        %v824 = vpop.f32.mrf.mxu0
        %825 = vmatprep.mubr.f32.mxu0 0.0
        %826 = vmatmul.mubr.f32.gmra.mxu0 %v468
        %v827 = vpop.f32.mrf.mxu0
        %v828 = vadd.f32 %v311, %v827
        %v829 = vpop.f32.mrf.mxu0
        %830 = vmatprep.mubr.f32.mxu0 0.0
        %831 = vmatmul.mubr.f32.gmra.mxu0 %v471
        %v832 = vpop.f32.mrf.mxu0
        %v833 = vadd.f32 %v311, %v832
        %v834 = vpop.f32.mrf.mxu0
        %835 = vmatprep.mubr.f32.mxu0 0.0
        %836 = vmatmul.mubr.f32.gmra.mxu0 %v474
        %v837 = vpop.f32.mrf.mxu0
        %v838 = vadd.f32 %v311, %v837
        %v839 = vpop.f32.mrf.mxu0
        %840 = vmatprep.mubr.f32.mxu0 0.0
        %841 = vmatmul.mubr.f32.gmra.mxu0 %v477
        %v842 = vpop.f32.mrf.mxu0
        %v843 = vadd.f32 %v311, %v842
        %v844 = vpop.f32.mrf.mxu0
        %845 = vmatprep.mubr.f32.mxu0 0.0
        %846 = vmatmul.mubr.f32.gmra.mxu0 %v480
        %v847 = vpop.f32.mrf.mxu0
        %v848 = vadd.f32 %v311, %v847
        %v849 = vpop.f32.mrf.mxu0
        %850 = vmatprep.mubr.f32.mxu0 0.0
        %851 = vmatmul.mubr.f32.gmra.mxu0 %v483
        %v852 = vpop.f32.mrf.mxu0
        %v853 = vadd.f32 %v311, %v852
        %v854 = vpop.f32.mrf.mxu0
        %855 = vmatprep.mubr.f32.mxu0 0.0
        %856 = vmatmul.mubr.f32.gmra.mxu0 %v486
        %v857 = vpop.f32.mrf.mxu0
        %v858 = vadd.f32 %v311, %v857
        %v859 = vpop.f32.mrf.mxu0
        %860 = vmatprep.mubr.f32.mxu0 0.0
        %861 = vmatmul.mubr.f32.gmra.mxu0 %v489
        %v862 = vpop.f32.mrf.mxu0
        %v863 = vadd.f32 %v311, %v862
        %v864 = vpop.f32.mrf.mxu0
        %865 = vmatprep.mubr.f32.mxu0 0.0
        %866 = vmatmul.mubr.f32.gmra.mxu0 %v492
        %v867 = vpop.f32.mrf.mxu0
        %v868 = vadd.f32 %v311, %v867
        %v869 = vpop.f32.mrf.mxu0
        %870 = vmatprep.mubr.f32.mxu0 0.0
        %871 = vmatmul.mubr.f32.gmra.mxu0 %v495
        %v872 = vpop.f32.mrf.mxu0
        %v873 = vadd.f32 %v311, %v872
        %v874 = vpop.f32.mrf.mxu0
        %875 = vmatprep.mubr.f32.mxu0 0.0
        %876 = vmatmul.mubr.f32.gmra.mxu0 %v498
        %v877 = vpop.f32.mrf.mxu0
        %v878 = vadd.f32 %v311, %v877
        %v879 = vpop.f32.mrf.mxu0
        %880 = vmatprep.mubr.f32.mxu0 0.0
        %881 = vmatmul.mubr.f32.gmra.mxu0 %v501
        %v882 = vpop.f32.mrf.mxu0
        %v883 = vadd.f32 %v311, %v882
        %v884 = vpop.f32.mrf.mxu0
        %885 = vmatprep.mubr.f32.mxu0 0.0
        %886 = vmatmul.mubr.f32.gmra.mxu0 %v504
        %v887 = vpop.f32.mrf.mxu0
        %v888 = vadd.f32 %v311, %v887
        %v889 = vpop.f32.mrf.mxu0
        %890 = vdwg.mxu0
        %891 = vst [vmem:[%s207] sm:$0xff] %v573
        %892 = vst [vmem:[%s207 + $0x8] sm:$0xff] %v578
        %893 = vst [vmem:[%s207 + $0x10] sm:$0xff] %v583
        %894 = vst [vmem:[%s207 + $0x18] sm:$0xff] %v588
        %895 = vst [vmem:[%s207 + $0x20] sm:$0xff] %v593
        %896 = vst [vmem:[%s207 + $0x28] sm:$0xff] %v598
        %897 = vst [vmem:[%s207 + $0x30] sm:$0xff] %v603
        %898 = vst [vmem:[%s207 + $0x38] sm:$0xff] %v608
        %899 = vst [vmem:[%s207 + $0x40] sm:$0xff] %v613
        %900 = vst [vmem:[%s207 + $0x48] sm:$0xff] %v618
        %901 = vst [vmem:[%s207 + $0x50] sm:$0xff] %v623
        %902 = vst [vmem:[%s207 + $0x58] sm:$0xff] %v628
        %903 = vst [vmem:[%s207 + $0x60] sm:$0xff] %v633
        %904 = vst [vmem:[%s207 + $0x68] sm:$0xff] %v638
        %905 = vst [vmem:[%s207 + $0x70] sm:$0xff] %v643
        %906 = vst [vmem:[%s207 + $0x78] sm:$0xff] %v648
        %907 = vst [vmem:[%s207 + $0x80] sm:$0xff] %v653
        %908 = vst [vmem:[%s207 + $0x88] sm:$0xff] %v658
        %909 = vst [vmem:[%s207 + $0x90] sm:$0xff] %v663
        %910 = vst [vmem:[%s207 + $0x98] sm:$0xff] %v668
        %911 = vst [vmem:[%s207 + $0xa0] sm:$0xff] %v673
        %912 = vst [vmem:[%s207 + $0xa8] sm:$0xff] %v678
        %913 = vst [vmem:[%s207 + $0xb0] sm:$0xff] %v683
        %914 = vst [vmem:[%s207 + $0xb8] sm:$0xff] %v688
        %915 = vst [vmem:[%s207 + $0xc0] sm:$0xff] %v693
        %916 = vst [vmem:[%s207 + $0xc8] sm:$0xff] %v698
        %917 = vst [vmem:[%s207 + $0xd0] sm:$0xff] %v703
        %918 = vst [vmem:[%s207 + $0xd8] sm:$0xff] %v708
        %919 = vst [vmem:[%s207 + $0xe0] sm:$0xff] %v713
        %920 = vst [vmem:[%s207 + $0xe8] sm:$0xff] %v718
        %921 = vst [vmem:[%s207 + $0xf0] sm:$0xff] %v723
        %922 = vst [vmem:[%s207 + $0xf8] sm:$0xff] %v728
        %923 = vst [vmem:[%s207 + $0x100] sm:$0xff] %v733
        %924 = vst [vmem:[%s207 + $0x108] sm:$0xff] %v738
        %925 = vst [vmem:[%s207 + $0x110] sm:$0xff] %v743
        %926 = vst [vmem:[%s207 + $0x118] sm:$0xff] %v748
        %927 = vst [vmem:[%s207 + $0x120] sm:$0xff] %v753
        %928 = vst [vmem:[%s207 + $0x128] sm:$0xff] %v758
        %929 = vst [vmem:[%s207 + $0x130] sm:$0xff] %v763
        %930 = vst [vmem:[%s207 + $0x138] sm:$0xff] %v768
        %931 = vst [vmem:[%s207 + $0x140] sm:$0xff] %v773
        %932 = vst [vmem:[%s207 + $0x148] sm:$0xff] %v778
        %933 = vst [vmem:[%s207 + $0x150] sm:$0xff] %v783
        %934 = vst [vmem:[%s207 + $0x158] sm:$0xff] %v788
        %935 = vst [vmem:[%s207 + $0x160] sm:$0xff] %v793
        %936 = vst [vmem:[%s207 + $0x168] sm:$0xff] %v798
        %937 = vst [vmem:[%s207 + $0x170] sm:$0xff] %v803
        %938 = vst [vmem:[%s207 + $0x178] sm:$0xff] %v808
        %939 = vst [vmem:[%s207 + $0x180] sm:$0xff] %v813
        %940 = vst [vmem:[%s207 + $0x188] sm:$0xff] %v818
        %941 = vst [vmem:[%s207 + $0x190] sm:$0xff] %v823
        %942 = vst [vmem:[%s207 + $0x198] sm:$0xff] %v828
        %943 = vst [vmem:[%s207 + $0x1a0] sm:$0xff] %v833
        %944 = vst [vmem:[%s207 + $0x1a8] sm:$0xff] %v838
        %945 = vst [vmem:[%s207 + $0x1b0] sm:$0xff] %v843
        %946 = vst [vmem:[%s207 + $0x1b8] sm:$0xff] %v848
        %947 = vst [vmem:[%s207 + $0x1c0] sm:$0xff] %v853
        %948 = vst [vmem:[%s207 + $0x1c8] sm:$0xff] %v858
        %949 = vst [vmem:[%s207 + $0x1d0] sm:$0xff] %v863
        %950 = vst [vmem:[%s207 + $0x1d8] sm:$0xff] %v868
        %951 = vst [vmem:[%s207 + $0x1e0] sm:$0xff] %v873
        %952 = vst [vmem:[%s207 + $0x1e8] sm:$0xff] %v878
        %953 = vst [vmem:[%s207 + $0x1f0] sm:$0xff] %v883
        %954 = vst [vmem:[%s207 + $0x1f8] sm:$0xff] %v888
        %v955 = vsel %vm313, %v234, 0.0
        %956 = vadd.xlane.f32.xlu0 %v955
        %v957 = vpop.xlane.xlu0 %956
        %v958 = vsel %vm313, %v235, 0.0
        %959 = vadd.xlane.f32.xlu0 %v958
        %v960 = vpop.xlane.xlu0 %959
        %v961 = vsel %vm313, %v236, 0.0
        %962 = vadd.xlane.f32.xlu0 %v961
        %v963 = vpop.xlane.xlu0 %962
        %v964 = vsel %vm313, %v237, 0.0
        %965 = vadd.xlane.f32.xlu0 %v964
        %v966 = vpop.xlane.xlu0 %965
        %v967 = vsel %vm313, %v238, 0.0
        %968 = vadd.xlane.f32.xlu0 %v967
        %v969 = vpop.xlane.xlu0 %968
        %v970 = vsel %vm313, %v239, 0.0
        %971 = vadd.xlane.f32.xlu0 %v970
        %v972 = vpop.xlane.xlu0 %971
        %v973 = vsel %vm313, %v240, 0.0
        %974 = vadd.xlane.f32.xlu0 %v973
        %v975 = vpop.xlane.xlu0 %974
        %v976 = vsel %vm313, %v241, 0.0
        %977 = vadd.xlane.f32.xlu0 %v976
        %v978 = vpop.xlane.xlu0 %977
        %v979 = vsel %vm313, %v242, 0.0
        %980 = vadd.xlane.f32.xlu0 %v979
        %v981 = vpop.xlane.xlu0 %980
        %v982 = vsel %vm313, %v243, 0.0
        %983 = vadd.xlane.f32.xlu0 %v982
        %v984 = vpop.xlane.xlu0 %983
        %v985 = vsel %vm313, %v244, 0.0
        %986 = vadd.xlane.f32.xlu0 %v985
        %v987 = vpop.xlane.xlu0 %986
        %v988 = vsel %vm313, %v245, 0.0
        %989 = vadd.xlane.f32.xlu0 %v988
        %v990 = vpop.xlane.xlu0 %989
        %v991 = vsel %vm313, %v246, 0.0
        %992 = vadd.xlane.f32.xlu0 %v991
        %v993 = vpop.xlane.xlu0 %992
        %v994 = vsel %vm313, %v247, 0.0
        %995 = vadd.xlane.f32.xlu0 %v994
        %v996 = vpop.xlane.xlu0 %995
        %v997 = vsel %vm313, %v248, 0.0
        %998 = vadd.xlane.f32.xlu0 %v997
        %v999 = vpop.xlane.xlu0 %998
        %v1000 = vsel %vm313, %v249, 0.0
        %1001 = vadd.xlane.f32.xlu0 %v1000
        %v1002 = vpop.xlane.xlu0 %1001
        %v1003 = vsel %vm313, %v250, 0.0
        %1004 = vadd.xlane.f32.xlu0 %v1003
        %v1005 = vpop.xlane.xlu0 %1004
        %v1006 = vsel %vm313, %v251, 0.0
        %1007 = vadd.xlane.f32.xlu0 %v1006
        %v1008 = vpop.xlane.xlu0 %1007
        %v1009 = vsel %vm313, %v252, 0.0
        %1010 = vadd.xlane.f32.xlu0 %v1009
        %v1011 = vpop.xlane.xlu0 %1010
        %v1012 = vsel %vm313, %v253, 0.0
        %1013 = vadd.xlane.f32.xlu0 %v1012
        %v1014 = vpop.xlane.xlu0 %1013
        %v1015 = vsel %vm313, %v254, 0.0
        %1016 = vadd.xlane.f32.xlu0 %v1015
        %v1017 = vpop.xlane.xlu0 %1016
        %v1018 = vsel %vm313, %v255, 0.0
        %1019 = vadd.xlane.f32.xlu0 %v1018
        %v1020 = vpop.xlane.xlu0 %1019
        %v1021 = vsel %vm313, %v256, 0.0
        %1022 = vadd.xlane.f32.xlu0 %v1021
        %v1023 = vpop.xlane.xlu0 %1022
        %v1024 = vsel %vm313, %v257, 0.0
        %1025 = vadd.xlane.f32.xlu0 %v1024
        %v1026 = vpop.xlane.xlu0 %1025
        %v1027 = vsel %vm313, %v258, 0.0
        %1028 = vadd.xlane.f32.xlu0 %v1027
        %v1029 = vpop.xlane.xlu0 %1028
        %v1030 = vsel %vm313, %v259, 0.0
        %1031 = vadd.xlane.f32.xlu0 %v1030
        %v1032 = vpop.xlane.xlu0 %1031
        %v1033 = vsel %vm313, %v260, 0.0
        %1034 = vadd.xlane.f32.xlu0 %v1033
        %v1035 = vpop.xlane.xlu0 %1034
        %v1036 = vsel %vm313, %v261, 0.0
        %1037 = vadd.xlane.f32.xlu0 %v1036
        %v1038 = vpop.xlane.xlu0 %1037
        %v1039 = vsel %vm313, %v262, 0.0
        %1040 = vadd.xlane.f32.xlu0 %v1039
        %v1041 = vpop.xlane.xlu0 %1040
        %v1042 = vsel %vm313, %v263, 0.0
        %1043 = vadd.xlane.f32.xlu0 %v1042
        %v1044 = vpop.xlane.xlu0 %1043
        %v1045 = vsel %vm313, %v264, 0.0
        %1046 = vadd.xlane.f32.xlu0 %v1045
        %v1047 = vpop.xlane.xlu0 %1046
        %v1048 = vsel %vm313, %v265, 0.0
        %1049 = vadd.xlane.f32.xlu0 %v1048
        %v1050 = vpop.xlane.xlu0 %1049
        %v1051 = vsel %vm313, %v266, 0.0
        %1052 = vadd.xlane.f32.xlu0 %v1051
        %v1053 = vpop.xlane.xlu0 %1052
        %v1054 = vsel %vm313, %v267, 0.0
        %1055 = vadd.xlane.f32.xlu0 %v1054
        %v1056 = vpop.xlane.xlu0 %1055
        %v1057 = vsel %vm313, %v268, 0.0
        %1058 = vadd.xlane.f32.xlu0 %v1057
        %v1059 = vpop.xlane.xlu0 %1058
        %v1060 = vsel %vm313, %v269, 0.0
        %1061 = vadd.xlane.f32.xlu0 %v1060
        %v1062 = vpop.xlane.xlu0 %1061
        %v1063 = vsel %vm313, %v270, 0.0
        %1064 = vadd.xlane.f32.xlu0 %v1063
        %v1065 = vpop.xlane.xlu0 %1064
        %v1066 = vsel %vm313, %v271, 0.0
        %1067 = vadd.xlane.f32.xlu0 %v1066
        %v1068 = vpop.xlane.xlu0 %1067
        %v1069 = vsel %vm313, %v272, 0.0
        %1070 = vadd.xlane.f32.xlu0 %v1069
        %v1071 = vpop.xlane.xlu0 %1070
        %v1072 = vsel %vm313, %v273, 0.0
        %1073 = vadd.xlane.f32.xlu0 %v1072
        %v1074 = vpop.xlane.xlu0 %1073
        %v1075 = vsel %vm313, %v274, 0.0
        %1076 = vadd.xlane.f32.xlu0 %v1075
        %v1077 = vpop.xlane.xlu0 %1076
        %v1078 = vsel %vm313, %v275, 0.0
        %1079 = vadd.xlane.f32.xlu0 %v1078
        %v1080 = vpop.xlane.xlu0 %1079
        %v1081 = vsel %vm313, %v276, 0.0
        %1082 = vadd.xlane.f32.xlu0 %v1081
        %v1083 = vpop.xlane.xlu0 %1082
        %v1084 = vsel %vm313, %v277, 0.0
        %1085 = vadd.xlane.f32.xlu0 %v1084
        %v1086 = vpop.xlane.xlu0 %1085
        %v1087 = vsel %vm313, %v278, 0.0
        %1088 = vadd.xlane.f32.xlu0 %v1087
        %v1089 = vpop.xlane.xlu0 %1088
        %v1090 = vsel %vm313, %v279, 0.0
        %1091 = vadd.xlane.f32.xlu0 %v1090
        %v1092 = vpop.xlane.xlu0 %1091
        %v1093 = vsel %vm313, %v280, 0.0
        %1094 = vadd.xlane.f32.xlu0 %v1093
        %v1095 = vpop.xlane.xlu0 %1094
        %v1096 = vsel %vm313, %v281, 0.0
        %1097 = vadd.xlane.f32.xlu0 %v1096
        %v1098 = vpop.xlane.xlu0 %1097
        %v1099 = vsel %vm313, %v282, 0.0
        %1100 = vadd.xlane.f32.xlu0 %v1099
        %v1101 = vpop.xlane.xlu0 %1100
        %v1102 = vsel %vm313, %v283, 0.0
        %1103 = vadd.xlane.f32.xlu0 %v1102
        %v1104 = vpop.xlane.xlu0 %1103
        %v1105 = vsel %vm313, %v284, 0.0
        %1106 = vadd.xlane.f32.xlu0 %v1105
        %v1107 = vpop.xlane.xlu0 %1106
        %v1108 = vsel %vm313, %v285, 0.0
        %1109 = vadd.xlane.f32.xlu0 %v1108
        %v1110 = vpop.xlane.xlu0 %1109
        %v1111 = vsel %vm313, %v286, 0.0
        %1112 = vadd.xlane.f32.xlu0 %v1111
        %v1113 = vpop.xlane.xlu0 %1112
        %v1114 = vsel %vm313, %v287, 0.0
        %1115 = vadd.xlane.f32.xlu0 %v1114
        %v1116 = vpop.xlane.xlu0 %1115
        %v1117 = vsel %vm313, %v288, 0.0
        %1118 = vadd.xlane.f32.xlu0 %v1117
        %v1119 = vpop.xlane.xlu0 %1118
        %v1120 = vsel %vm313, %v289, 0.0
        %1121 = vadd.xlane.f32.xlu0 %v1120
        %v1122 = vpop.xlane.xlu0 %1121
        %v1123 = vsel %vm313, %v290, 0.0
        %1124 = vadd.xlane.f32.xlu0 %v1123
        %v1125 = vpop.xlane.xlu0 %1124
        %v1126 = vsel %vm313, %v291, 0.0
        %1127 = vadd.xlane.f32.xlu0 %v1126
        %v1128 = vpop.xlane.xlu0 %1127
        %v1129 = vsel %vm313, %v292, 0.0
        %1130 = vadd.xlane.f32.xlu0 %v1129
        %v1131 = vpop.xlane.xlu0 %1130
        %v1132 = vsel %vm313, %v293, 0.0
        %1133 = vadd.xlane.f32.xlu0 %v1132
        %v1134 = vpop.xlane.xlu0 %1133
        %v1135 = vsel %vm313, %v294, 0.0
        %1136 = vadd.xlane.f32.xlu0 %v1135
        %v1137 = vpop.xlane.xlu0 %1136
        %v1138 = vsel %vm313, %v295, 0.0
        %1139 = vadd.xlane.f32.xlu0 %v1138
        %v1140 = vpop.xlane.xlu0 %1139
        %v1141 = vsel %vm313, %v296, 0.0
        %1142 = vadd.xlane.f32.xlu0 %v1141
        %v1143 = vpop.xlane.xlu0 %1142
        %v1144 = vsel %vm313, %v297, 0.0
        %1145 = vadd.xlane.f32.xlu0 %v1144
        %v1146 = vpop.xlane.xlu0 %1145
        %1147 = vxpose.xlu0.b32.start [1/16] %v957, 128
        %1148 = vxpose.xlu0.b32.cont [2/16] %v960, 128
        %1149 = vxpose.xlu0.b32.cont [3/16] %v963, 128
        %1150 = vxpose.xlu0.b32.cont [4/16] %v966, 128
        %1151 = vxpose.xlu0.b32.cont [5/16] %v969, 128
        %1152 = vxpose.xlu0.b32.cont [6/16] %v972, 128
        %1153 = vxpose.xlu0.b32.cont [7/16] %v975, 128
        %1154 = vxpose.xlu0.b32.cont [8/16] %v978, 128
        %1155 = vxpose.xlu0.b32.cont [9/16] %v981, 128
        %1156 = vxpose.xlu0.b32.cont [10/16] %v984, 128
        %1157 = vxpose.xlu0.b32.cont [11/16] %v987, 128
        %1158 = vxpose.xlu0.b32.cont [12/16] %v990, 128
        %1159 = vxpose.xlu0.b32.cont [13/16] %v993, 128
        %1160 = vxpose.xlu0.b32.cont [14/16] %v996, 128
        %1161 = vxpose.xlu0.b32.cont [15/16] %v999, 128
        %1162 = vxpose.xlu0.b32.end [16/16] %v1002, 128
        %v1163 = vpop.trf.xlu0
        %v1164 = vpop.trf.xlu0
        %v1165 = vpop.trf.xlu0
        %v1166 = vpop.trf.xlu0
        %v1167 = vpop.trf.xlu0
        %v1168 = vpop.trf.xlu0
        %v1169 = vpop.trf.xlu0
        %v1170 = vpop.trf.xlu0
        %v1171 = vpop.trf.xlu0
        %v1172 = vpop.trf.xlu0
        %v1173 = vpop.trf.xlu0
        %v1174 = vpop.trf.xlu0
        %v1175 = vpop.trf.xlu0
        %v1176 = vpop.trf.xlu0
        %v1177 = vpop.trf.xlu0
        %v1178 = vpop.trf.xlu0
        %1179 = vxpose.xlu0.b32.start [1/16] %v1005, 128
        %1180 = vxpose.xlu0.b32.cont [2/16] %v1008, 128
        %1181 = vxpose.xlu0.b32.cont [3/16] %v1011, 128
        %1182 = vxpose.xlu0.b32.cont [4/16] %v1014, 128
        %1183 = vxpose.xlu0.b32.cont [5/16] %v1017, 128
        %1184 = vxpose.xlu0.b32.cont [6/16] %v1020, 128
        %1185 = vxpose.xlu0.b32.cont [7/16] %v1023, 128
        %1186 = vxpose.xlu0.b32.cont [8/16] %v1026, 128
        %1187 = vxpose.xlu0.b32.cont [9/16] %v1029, 128
        %1188 = vxpose.xlu0.b32.cont [10/16] %v1032, 128
        %1189 = vxpose.xlu0.b32.cont [11/16] %v1035, 128
        %1190 = vxpose.xlu0.b32.cont [12/16] %v1038, 128
        %1191 = vxpose.xlu0.b32.cont [13/16] %v1041, 128
        %1192 = vxpose.xlu0.b32.cont [14/16] %v1044, 128
        %1193 = vxpose.xlu0.b32.cont [15/16] %v1047, 128
        %1194 = vxpose.xlu0.b32.end [16/16] %v1050, 128
        %v1195 = vpop.trf.xlu0
        %v1196 = vpop.trf.xlu0
        %v1197 = vpop.trf.xlu0
        %v1198 = vpop.trf.xlu0
        %v1199 = vpop.trf.xlu0
        %v1200 = vpop.trf.xlu0
        %v1201 = vpop.trf.xlu0
        %v1202 = vpop.trf.xlu0
        %v1203 = vpop.trf.xlu0
        %v1204 = vpop.trf.xlu0
        %v1205 = vpop.trf.xlu0
        %v1206 = vpop.trf.xlu0
        %v1207 = vpop.trf.xlu0
        %v1208 = vpop.trf.xlu0
        %v1209 = vpop.trf.xlu0
        %v1210 = vpop.trf.xlu0
        %1211 = vxpose.xlu0.b32.start [1/16] %v1053, 128
        %1212 = vxpose.xlu0.b32.cont [2/16] %v1056, 128
        %1213 = vxpose.xlu0.b32.cont [3/16] %v1059, 128
        %1214 = vxpose.xlu0.b32.cont [4/16] %v1062, 128
        %1215 = vxpose.xlu0.b32.cont [5/16] %v1065, 128
        %1216 = vxpose.xlu0.b32.cont [6/16] %v1068, 128
        %1217 = vxpose.xlu0.b32.cont [7/16] %v1071, 128
        %1218 = vxpose.xlu0.b32.cont [8/16] %v1074, 128
        %1219 = vxpose.xlu0.b32.cont [9/16] %v1077, 128
        %1220 = vxpose.xlu0.b32.cont [10/16] %v1080, 128
        %1221 = vxpose.xlu0.b32.cont [11/16] %v1083, 128
        %1222 = vxpose.xlu0.b32.cont [12/16] %v1086, 128
        %1223 = vxpose.xlu0.b32.cont [13/16] %v1089, 128
        %1224 = vxpose.xlu0.b32.cont [14/16] %v1092, 128
        %1225 = vxpose.xlu0.b32.cont [15/16] %v1095, 128
        %1226 = vxpose.xlu0.b32.end [16/16] %v1098, 128
        %v1227 = vpop.trf.xlu0
        %v1228 = vpop.trf.xlu0
        %v1229 = vpop.trf.xlu0
        %v1230 = vpop.trf.xlu0
        %v1231 = vpop.trf.xlu0
        %v1232 = vpop.trf.xlu0
        %v1233 = vpop.trf.xlu0
        %v1234 = vpop.trf.xlu0
        %v1235 = vpop.trf.xlu0
        %v1236 = vpop.trf.xlu0
        %v1237 = vpop.trf.xlu0
        %v1238 = vpop.trf.xlu0
        %v1239 = vpop.trf.xlu0
        %v1240 = vpop.trf.xlu0
        %v1241 = vpop.trf.xlu0
        %v1242 = vpop.trf.xlu0
        %1243 = vxpose.xlu0.b32.start [1/16] %v1101, 128
        %1244 = vxpose.xlu0.b32.cont [2/16] %v1104, 128
        %1245 = vxpose.xlu0.b32.cont [3/16] %v1107, 128
        %1246 = vxpose.xlu0.b32.cont [4/16] %v1110, 128
        %1247 = vxpose.xlu0.b32.cont [5/16] %v1113, 128
        %1248 = vxpose.xlu0.b32.cont [6/16] %v1116, 128
        %1249 = vxpose.xlu0.b32.cont [7/16] %v1119, 128
        %1250 = vxpose.xlu0.b32.cont [8/16] %v1122, 128
        %1251 = vxpose.xlu0.b32.cont [9/16] %v1125, 128
        %1252 = vxpose.xlu0.b32.cont [10/16] %v1128, 128
        %1253 = vxpose.xlu0.b32.cont [11/16] %v1131, 128
        %1254 = vxpose.xlu0.b32.cont [12/16] %v1134, 128
        %1255 = vxpose.xlu0.b32.cont [13/16] %v1137, 128
        %1256 = vxpose.xlu0.b32.cont [14/16] %v1140, 128
        %1257 = vxpose.xlu0.b32.cont [15/16] %v1143, 128
        %1258 = vxpose.xlu0.b32.end [16/16] %v1146, 128
        %v1259 = vpop.trf.xlu0
        %v1260 = vpop.trf.xlu0
        %v1261 = vpop.trf.xlu0
        %v1262 = vpop.trf.xlu0
        %v1263 = vpop.trf.xlu0
        %v1264 = vpop.trf.xlu0
        %v1265 = vpop.trf.xlu0
        %v1266 = vpop.trf.xlu0
        %v1267 = vpop.trf.xlu0
        %v1268 = vpop.trf.xlu0
        %v1269 = vpop.trf.xlu0
        %v1270 = vpop.trf.xlu0
        %v1271 = vpop.trf.xlu0
        %v1272 = vpop.trf.xlu0
        %v1273 = vpop.trf.xlu0
        %v1274 = vpop.trf.xlu0
        %vm1275 = vcmp.eq.f32.partialorder %v1163, 0.0
        %vm1276 = vcmp.eq.f32.partialorder %v1195, 0.0
        %vm1277 = vcmp.eq.f32.partialorder %v1227, 0.0
        %vm1278 = vcmp.eq.f32.partialorder %v1259, 0.0
        %v1279 = vsel %vm1275, -100000.0, 0.0
        %v1280 = vsel %vm1276, -100000.0, 0.0
        %v1281 = vsel %vm1277, -100000.0, 0.0
        %v1282 = vsel %vm1278, -100000.0, 0.0
        %v1287 = vcombine.low %v1279, %v1280
        %v1288 = vcombine.low %v1281, %v1282
        %v1290 = vunpack.c.l.s4 1966171168
        %v1291 = vunpack.c.0.s8 %v1290
        %v1292 = vlaneseq
        %v1293 = vshrl.u32 %v1292, 7
        %v1294 = vsub.s32 %v1291, %v1293
        %v1295 = vrot.slane %v1287, %v1294
        %v1297 = vunpack.c.l.s4 1966171168
        %v1298 = vunpack.c.0.s8 %v1297
        %v1299 = vlaneseq
        %v1300 = vshrl.u32 %v1299, 7
        %v1301 = vsub.s32 %v1298, %v1300
        %v1302 = vrot.slane %v1288, %v1301
        %v1303 = vcombine.low %v1295, %v1302
        %v1305 = vunpack.c.l.s4 1966171168
        %v1306 = vunpack.c.0.s8 %v1305
        %v1307 = vlaneseq
        %v1308 = vshrl.u32 %v1307, 7
        %v1309 = vsub.s32 %v1306, %v1308
        %v1310 = vrot.slane %v1303, %v1309
        %v1312 = vlaneseq
        %vm1313 = vcmp.ge.s32.totalorder %v1312, 0
        %vm1314 = vcmp.lt.s32.totalorder %v1312, 512
        %vm1315 = vmand %vm1313, %vm1314
        %1316 = vst.msk [vmem:[%s214] sm:$0xf] %vm1315, %v1310
        %s1317 = sand.u32 %s98, 1
        %s1318 = scalar_lea.sflag [#allocation3], %s1317
        %s1319 = sand.u32 %s98, 1
        %s1320 = smul.addr %s1319, 512
        %s1321 = scalar_lea.vmem [#allocation2], %s1320
        %s1322 = sand.u32 %s124, 1
        %s1323 = scalar_lea.sflag [#allocation5], %s1322
        %s1324 = sand.u32 %s124, 1
        %s1325 = smul.addr %s1324, 4
        %s1326 = scalar_lea.vmem [#allocation4], %s1325
        // Predicated region
        $region33: #{tpu_custom_call.1} parent=31 // pred_check
          %p1327 = pneg %p108
        $region34: #{tpu_custom_call.1} parent=31 // pred_check_branch
          %1329 = sbr.rel (%p1327) target = $region36
        $region35: #{tpu_custom_call.1} parent=31 // pred_region
          %s1330 = smul.u32 64, %s22
          %s1331 = ssub.s32 75, %s1330
          %p1332 = scmp.lt.s32.totalorder %s1331, 64
          %s1333 = scalar_select %p1332, %s1331, 64
          %s1334 = smul.u32 128, %s1333
          %s1336 = ssub.s32 8192, %s1334
          %1337 = vsyncadd %s1318, %s1336
          %p1338 = scmp.ne.s32.totalorder 0, %s1334
          %s1339 = smul.addr %s1330, 128
          %s1340 = scalar_lea.hbm %s3, %s1339
          %s1341 = smul.u32 8, %s1333
          %s1342 = sshll.u32 %s1321, 4
          %s1343 = int_to_ptr.vmem [resolvable:$true] %s1342
          %s1344 = sshll.u32 %s1341, 4
          %1348 = dma.vmem_to_hbm [thread:$0]  (%p1338), %s1343, %s1344, %s1340, %s1318, 128, 128, 8
        $region36: #{tpu_custom_call.1} parent=31 // pred_fallthru
          _
        // Predicated region
        $region37: #{tpu_custom_call.1} parent=31 // pred_check
          %p1349 = pneg %p134
        $region38: #{tpu_custom_call.1} parent=31 // pred_check_branch
          %1351 = sbr.rel (%p1349) target = $region40
        $region39: #{tpu_custom_call.1} parent=31 // pred_region
          %s1353 = ssub.s32 64, 64
          %1354 = vsyncadd %s1323, %s1353
          %s1355 = smul.addr %s22, 4
          %s1356 = smul.addr %s1355, 16
          %s1357 = scalar_lea.hbm %s4, %s1356
          %s1359 = sshll.u32 %s1326, 4
          %s1360 = int_to_ptr.vmem [resolvable:$true] %s1359
          %1362 = dma.vmem_to_hbm [thread:$0]  %s1360, 64, %s1357, %s1323
        $region40: #{tpu_custom_call.1} parent=31 // pred_fallthru
          _
      $region32: #{tpu_custom_call.1} parent=5 // pred_fallthru
        _
      %p1363 = scmp.le.s32.totalorder 2, %s17
      // Predicated region
      $region41: #{tpu_custom_call.1} parent=5 // pred_check
        %p1364 = pneg %p1363
      $region42: #{tpu_custom_call.1} parent=5 // pred_check_branch
        %1366 = sbr.rel (%p1364) target = $region44
      $region43: #{tpu_custom_call.1} parent=5 // pred_region
        %s1367 = ssub.s32 %s17, 2
        // Predicated region
        $region45: #{tpu_custom_call.1} parent=43 // pred_check
          %p1368 = pneg %p114
        $region46: #{tpu_custom_call.1} parent=43 // pred_check_branch
          %1370 = sbr.rel (%p1368) target = $region48
        $region47: #{tpu_custom_call.1} parent=43 // pred_region
          %s1371 = sand.u32 %s99, 1
          %s1372 = scalar_lea.sflag [#allocation3], %s1371
          %s1373 = sand.u32 %s99, 1
          %s1374 = smul.addr %s1373, 512
          %s1375 = scalar_lea.vmem [#allocation2], %s1374
          %1376 = dma.done %s1372, 8192
        $region48: #{tpu_custom_call.1} parent=43 // pred_fallthru
          _
        // Predicated region
        $region49: #{tpu_custom_call.1} parent=43 // pred_check
          %p1377 = pneg %p140
        $region50: #{tpu_custom_call.1} parent=43 // pred_check_branch
          %1379 = sbr.rel (%p1377) target = $region52
        $region51: #{tpu_custom_call.1} parent=43 // pred_region
          %s1380 = sand.u32 %s125, 1
          %s1381 = scalar_lea.sflag [#allocation5], %s1380
          %s1382 = sand.u32 %s125, 1
          %s1383 = smul.addr %s1382, 4
          %s1384 = scalar_lea.vmem [#allocation4], %s1383
          %1385 = dma.done %s1381, 64
        $region52: #{tpu_custom_call.1} parent=43 // pred_fallthru
          _
      $region44: #{tpu_custom_call.1} parent=5 // pred_fallthru
        _
    $region6: #{tpu_custom_call.1} parent=1 // loop_footer
      %s21 = sadd.s32 1, %s17
    $region7: #{tpu_custom_call.1} parent=1 // loop_footer_branch
      %16 = sbr.rel target = $region3
    $region8: #{tpu_custom_call.1} parent=1 // loop_exit
      _
    %1386 = vsyncpa [#allocation3], 1
    %s1387 = scalar_lea.sflag [#allocation3], 1
    %1388 = vsyncpa %s1387, 1
    %1389 = vsyncpa [#allocation5], 1
    %s1390 = scalar_lea.sflag [#allocation5], 1
    %1391 = vsyncpa %s1390, 1

</llo_original>
